<compile_context>
chip_gen: v5e
topology: v5e:2x2
jax: 0.10.0
libtpu: 0.0.40
codegen_flags: <defaults>
</compile_context>

<pallas_src>
import jax
import jax.numpy as jnp
from jax.experimental import pallas as pl
from jax.experimental.pallas import tpu as pltpu


def actor_critic_kernel(x_ref, w1_ref, b1_ref, wh_ref, bh_ref, out_ref):
    # common layer: Linear + ReLU (weights stored (in, out): MXU-native, no transpose)
    h = jnp.dot(x_ref[...], w1_ref[...], preferred_element_type=jnp.float32)
    h = jnp.maximum(h + b1_ref[...], 0.0)                       # (TB, H)

    # fused actor+critic head: one MXU pass producing [actor logits | state value]
    out_ref[...] = (jnp.dot(h, wh_ref[...], preferred_element_type=jnp.float32)
                    + bh_ref[...])                              # (TB, A+1)


def pack_params(params):
    """One-time repack for the kernel: pre-transposed weights, fused heads."""
    w1_t = jnp.asarray(params["w1"]).T                                   # (Din, H)
    b1 = jnp.asarray(params["b1"]).reshape(1, -1)                        # (1, H)
    wh_t = jnp.concatenate([params["wa"], params["wv"]], axis=0).T       # (H, A+1)
    bh = jnp.concatenate([params["ba"].reshape(1, -1),
                          params["bv"].reshape(1, -1)], axis=1)          # (1, A+1)
    return {"w1_t": w1_t, "b1": b1, "wh_t": wh_t, "bh": bh}


def _round_up(n, m):
    return ((n + m - 1) // m) * m


def actor_critic_forward(x, packed, *, block_b=512):
    """x: (B, num_inputs) float32. packed: output of pack_params()."""
    B, Din = x.shape
    H = packed["w1_t"].shape[1]
    W = packed["wh_t"].shape[1]          # num_outputs + 1 (fused head width)
    A = W - 1

    # Tile the batch: TB rows per grid step (multiple of 8); pad B up to a full tile.
    TB = min(block_b, _round_up(B, 8))
    Bp = _round_up(B, TB)
    if Bp != B:
        x = jnp.pad(x, ((0, Bp - B), (0, 0)))
    grid = (Bp // TB,)

    cost = pl.CostEstimate(
        flops=2 * Bp * H * (Din + W),
        transcendentals=0,
        bytes_accessed=4 * (Bp * Din + Din * H + H + H * W + W + Bp * W),
    )

    out = pl.pallas_call(
        actor_critic_kernel,
        out_shape=jax.ShapeDtypeStruct((Bp, W), jnp.float32),
        grid_spec=pltpu.PrefetchScalarGridSpec(
            num_scalar_prefetch=0,
            grid=grid,
            in_specs=[
                pl.BlockSpec((TB, Din), lambda i: (i, 0)),   # x: streamed per batch tile
                pl.BlockSpec((Din, H), lambda i: (0, 0)),    # w1_t: resident across grid
                pl.BlockSpec((1, H), lambda i: (0, 0)),      # b1: resident
                pl.BlockSpec((H, W), lambda i: (0, 0)),      # fused head weight: resident
                pl.BlockSpec((1, W), lambda i: (0, 0)),      # fused head bias: resident
            ],
            out_specs=pl.BlockSpec((TB, W), lambda i: (i, 0)),
        ),
        compiler_params=pltpu.CompilerParams(
            dimension_semantics=("parallel",)),
        cost_estimate=cost,
    )(x, packed["w1_t"], packed["b1"], packed["wh_t"], packed["bh"])

    action_logits = out[:B, :A]          # (B, num_outputs)
    state_value = out[:B, A:]            # (B, 1)
    return action_logits, state_value


def init_params(key, num_inputs, hidden, num_outputs):
    """Deterministic PyTorch-style init: U(-1/sqrt(fan_in), 1/sqrt(fan_in))."""
    ks = jax.random.split(key, 6)

    def lin(kw, kb, fan_in, fan_out):
        bound = 1.0 / jnp.sqrt(jnp.float32(fan_in))
        w = jax.random.uniform(kw, (fan_out, fan_in), jnp.float32, -bound, bound)
        b = jax.random.uniform(kb, (1, fan_out), jnp.float32, -bound, bound)
        return w, b

    w1, b1 = lin(ks[0], ks[1], num_inputs, hidden)
    wa, ba = lin(ks[2], ks[3], hidden, num_outputs)
    wv, bv = lin(ks[4], ks[5], hidden, 1)
    return {"w1": w1, "b1": b1, "wa": wa, "ba": ba, "wv": wv, "bv": bv}


if __name__ == "__main__":
    key = jax.random.PRNGKey(0)
    k_params, k_x, k_x2 = jax.random.split(key, 3)

    B, NUM_INPUTS, HIDDEN, NUM_OUTPUTS = 8, 4, 32, 2   # CartPole-like dims
    params = init_params(k_params, NUM_INPUTS, HIDDEN, NUM_OUTPUTS)
    packed = pack_params(params)

    def ref_forward(xx):
        h = jnp.maximum(xx @ params["w1"].T + params["b1"], 0.0)
        return h @ params["wa"].T + params["ba"], h @ params["wv"].T + params["bv"]

    # 1) small single-tile case (grid of 1)
    x = jax.random.normal(k_x, (B, NUM_INPUTS), jnp.float32)
    action_logits, state_value = actor_critic_forward(x, packed)
    jax.block_until_ready((action_logits, state_value))
    a_ref, v_ref = ref_forward(x)
    assert action_logits.shape == (B, NUM_OUTPUTS)
    assert state_value.shape == (B, 1)
    assert jnp.allclose(action_logits, a_ref, atol=1e-5)
    assert jnp.allclose(state_value, v_ref, atol=1e-5)

    # 2) ragged batch exercising the grid + padding path (grid of 3, last tile padded)
    B2 = 20
    x2 = jax.random.normal(k_x2, (B2, NUM_INPUTS), jnp.float32)
    a2, v2 = actor_critic_forward(x2, packed, block_b=8)
    jax.block_until_ready((a2, v2))
    a2_ref, v2_ref = ref_forward(x2)
    assert a2.shape == (B2, NUM_OUTPUTS) and v2.shape == (B2, 1)
    assert jnp.allclose(a2, a2_ref, atol=1e-5)
    assert jnp.allclose(v2, v2_ref, atol=1e-5)

    print("KERNEL_OK")
</pallas_src>

<mosaic_0001>
module attributes {stable_mosaic.version = 11 : i64} {
  func.func @actor_critic_kernel(%arg0: i32, %arg1: memref<8x4xf32, #tpu.memory_space<vmem>>, %arg2: memref<4x32xf32, #tpu.memory_space<vmem>>, %arg3: memref<1x32xf32, #tpu.memory_space<vmem>>, %arg4: memref<32x3xf32, #tpu.memory_space<vmem>>, %arg5: memref<1x3xf32, #tpu.memory_space<vmem>>, %arg6: memref<8x3xf32, #tpu.memory_space<vmem>>) attributes {dimension_semantics = [#tpu.dimension_semantics<parallel>], iteration_bounds = array<i64: 1>, scalar_prefetch = 0 : i64, scratch_operands = 0 : i64, tpu.core_type = #tpu.core_type<tc>, window_params = [{transform_indices = @transform_0, window_bounds = array<i64: 8, 4>}, {pipeline_mode = #tpu.pipeline_mode<synchronous>, transform_indices = @transform_1, window_bounds = array<i64: 4, 32>}, {pipeline_mode = #tpu.pipeline_mode<synchronous>, transform_indices = @transform_2, window_bounds = array<i64: 1, 32>}, {pipeline_mode = #tpu.pipeline_mode<synchronous>, transform_indices = @transform_3, window_bounds = array<i64: 32, 3>}, {pipeline_mode = #tpu.pipeline_mode<synchronous>, transform_indices = @transform_4, window_bounds = array<i64: 1, 3>}, {transform_indices = @transform_5, window_bounds = array<i64: 8, 3>}]} {
    %c0 = arith.constant 0 : index
    %c0_0 = arith.constant 0 : index
    %0 = vector.load %arg1[%c0, %c0_0] : memref<8x4xf32, #tpu.memory_space<vmem>>, vector<8x4xf32>
    %c0_1 = arith.constant 0 : index
    %c0_2 = arith.constant 0 : index
    %1 = vector.load %arg2[%c0_1, %c0_2] : memref<4x32xf32, #tpu.memory_space<vmem>>, vector<4x32xf32>
    %cst = arith.constant dense<0.000000e+00> : vector<8x32xf32>
    %2 = tpu.matmul %0, %1, %cst {dimension_numbers = #tpu.dot_dimension_numbers<[1], [0], [0], [1], [0, 0, 1, 1], [], []>} : vector<8x4xf32>, vector<4x32xf32>, vector<8x32xf32> -> vector<8x32xf32>
    %c0_3 = arith.constant 0 : index
    %c0_4 = arith.constant 0 : index
    %3 = vector.load %arg3[%c0_3, %c0_4] : memref<1x32xf32, #tpu.memory_space<vmem>>, vector<1x32xf32>
    %4 = vector.broadcast %3 : vector<1x32xf32> to vector<8x32xf32>
    %5 = arith.addf %2, %4 : vector<8x32xf32>
    %cst_5 = arith.constant 0.000000e+00 : f32
    %6 = vector.broadcast %cst_5 : f32 to vector<8x32xf32>
    %7 = arith.maximumf %5, %6 : vector<8x32xf32>
    %c0_6 = arith.constant 0 : index
    %c0_7 = arith.constant 0 : index
    %8 = vector.load %arg4[%c0_6, %c0_7] : memref<32x3xf32, #tpu.memory_space<vmem>>, vector<32x3xf32>
    %cst_8 = arith.constant dense<0.000000e+00> : vector<8x3xf32>
    %9 = tpu.matmul %7, %8, %cst_8 {dimension_numbers = #tpu.dot_dimension_numbers<[1], [0], [0], [1], [0, 0, 1, 1], [], []>} : vector<8x32xf32>, vector<32x3xf32>, vector<8x3xf32> -> vector<8x3xf32>
    %c0_9 = arith.constant 0 : index
    %c0_10 = arith.constant 0 : index
    %10 = vector.load %arg5[%c0_9, %c0_10] : memref<1x3xf32, #tpu.memory_space<vmem>>, vector<1x3xf32>
    %11 = vector.broadcast %10 : vector<1x3xf32> to vector<8x3xf32>
    %12 = arith.addf %9, %11 : vector<8x3xf32>
    %c0_11 = arith.constant 0 : index
    %c0_12 = arith.constant 0 : index
    %13 = vector.load %arg6[%c0_11, %c0_12] : memref<8x3xf32, #tpu.memory_space<vmem>>, vector<8x3xf32>
    tpu.vector_store %arg6[%c0_11, %c0_12], %12 {strides = array<i32>} : memref<8x3xf32, #tpu.memory_space<vmem>>, vector<8x3xf32>,
    return
  }
  func.func @transform_0(%arg0: i32) -> (i32, i32) {
    %c0_i32 = arith.constant 0 : i32
    %c0_i32_0 = arith.constant 0 : i32
    return %arg0, %c0_i32 : i32, i32
  }
  func.func @transform_1(%arg0: i32) -> (i32, i32) {
    %c0_i32 = arith.constant 0 : i32
    %c0_i32_0 = arith.constant 0 : i32
    %c0_i32_1 = arith.constant 0 : i32
    return %c0_i32, %c0_i32_0 : i32, i32
  }
  func.func @transform_2(%arg0: i32) -> (i32, i32) {
    %c0_i32 = arith.constant 0 : i32
    %c0_i32_0 = arith.constant 0 : i32
    %c0_i32_1 = arith.constant 0 : i32
    return %c0_i32, %c0_i32_0 : i32, i32
  }
  func.func @transform_3(%arg0: i32) -> (i32, i32) {
    %c0_i32 = arith.constant 0 : i32
    %c0_i32_0 = arith.constant 0 : i32
    %c0_i32_1 = arith.constant 0 : i32
    return %c0_i32, %c0_i32_0 : i32, i32
  }
  func.func @transform_4(%arg0: i32) -> (i32, i32) {
    %c0_i32 = arith.constant 0 : i32
    %c0_i32_0 = arith.constant 0 : i32
    %c0_i32_1 = arith.constant 0 : i32
    return %c0_i32, %c0_i32_0 : i32, i32
  }
  func.func @transform_5(%arg0: i32) -> (i32, i32) {
    %c0_i32 = arith.constant 0 : i32
    %c0_i32_0 = arith.constant 0 : i32
    return %arg0, %c0_i32 : i32, i32
  }
}

</mosaic_0001>

<llo_original>
// kernel: tpu_custom_call.1
$region0: #{tpu_custom_call.1}
  #allocation0 [shape = 'u32[]', space=smem, size = 0x4, offset = 0x4, fixed_abs, tag = 'smem constant byte address 0x4 - core index']
  #allocation1 [shape = 'u32[72,128]{1,0:T(1,128)}', space=vmem, size = 0x9000, scoped, tag = 'internal scratch']
  %s0 = inlined_call_operand.vmem [shape: f32[8,4], index: 0, kind: input, shape index: {}]
  %s1 = inlined_call_operand.vmem [shape: f32[4,32], index: 1, kind: input, shape index: {}]
  %s2 = inlined_call_operand.vmem [shape: f32[1,32], index: 2, kind: input, shape index: {}]
  %s3 = inlined_call_operand.vmem [shape: f32[32,3], index: 3, kind: input, shape index: {}]
  %s4 = inlined_call_operand.vmem [shape: f32[1,3], index: 4, kind: input, shape index: {}]
  %s5 = inlined_call_operand.vmem [shape: f32[8,3], index: 5, kind: output, shape index: {}]
  %s6 = sld [smem:[#allocation0]]
  $region30: #{tpu_custom_call.1} parent=0
    _
  %s8 = ssub.s32 1, %s6
  %s9 = scalar_select 0, %s8, %s6
  // Predicated region
  $region2: #{tpu_custom_call.1} parent=0 // pred_check
    _
  $region3: #{tpu_custom_call.1} parent=0 // pred_check_branch
    %11 = sbr.rel (0) target = $region5
  $region4: #{tpu_custom_call.1} parent=0 // pred_region
    _
  $region5: #{tpu_custom_call.1} parent=0 // pred_fallthru
    _
  // Predicated region
  $region6: #{tpu_custom_call.1} parent=0 // pred_check
    _
  $region7: #{tpu_custom_call.1} parent=0 // pred_check_branch
    %13 = sbr.rel (0) target = $region9
  $region8: #{tpu_custom_call.1} parent=0 // pred_region
    _
  $region9: #{tpu_custom_call.1} parent=0 // pred_fallthru
    _
  // Predicated region
  $region10: #{tpu_custom_call.1} parent=0 // pred_check
    _
  $region11: #{tpu_custom_call.1} parent=0 // pred_check_branch
    %15 = sbr.rel (0) target = $region13
  $region12: #{tpu_custom_call.1} parent=0 // pred_region
    _
  $region13: #{tpu_custom_call.1} parent=0 // pred_fallthru
    _
  // Predicated region
  $region14: #{tpu_custom_call.1} parent=0 // pred_check
    _
  $region15: #{tpu_custom_call.1} parent=0 // pred_check_branch
    %17 = sbr.rel (0) target = $region17
  $region16: #{tpu_custom_call.1} parent=0 // pred_region
    _
  $region17: #{tpu_custom_call.1} parent=0 // pred_fallthru
    _
  // Predicated region
  $region18: #{tpu_custom_call.1} parent=0 // pred_check
    _
  $region19: #{tpu_custom_call.1} parent=0 // pred_check_branch
    %19 = sbr.rel (0) target = $region21
  $region20: #{tpu_custom_call.1} parent=0 // pred_region
    _
  $region21: #{tpu_custom_call.1} parent=0 // pred_fallthru
    _
  %v20 = vld [vmem:[%s0] sm:$0xff]
  %v21 = vld [vmem:[%s1] sm:$0xf]
  %v22 = vld [vmem:[%s2] sm:$0x1]
  %v24 = vperm.slane %v22, 0
  %vm26 = vcmask 31744
  %v28 = vsel %vm26, %v20, 0
  %vm30 = vcmask 1043456
  %v32 = vsel %vm30, %v21, 0
  %34 = vmatpush.msra.mxu0 0.0
  %35 = vmatpush.msra.mxu0 0.0
  %36 = vmatpush.msra.mxu0 0.0
  %37 = vmatpush.msra.mxu0 0.0
  %38 = vmatpush.msra.mxu0 0.0
  %39 = vmatpush.msra.mxu0 0.0
  %40 = vmatpush.msra.mxu0 0.0
  %41 = vmatpush.msra.mxu0 0.0
  %42 = vmatpush.msra.mxu0 0.0
  %43 = vmatpush.msra.mxu0 0.0
  %44 = vmatpush.msra.mxu0 0.0
  %45 = vmatpush.msra.mxu0 0.0
  %46 = vmatpush.msra.mxu0 0.0
  %47 = vmatpush.msra.mxu0 0.0
  %48 = vmatpush.msra.mxu0 0.0
  %49 = vmatpush.msra.mxu0 %v32
  %50 = vmatmul.f32.gmra.mxu0 %v28
  %v51 = vpop.f32.mrf.mxu0
  %v52 = vadd.f32 %v24, %v51
  %53 = vdwg.mxu0
  %v54 = vmax.f32 %v52, 0.0
  %v55 = vld [vmem:[%s3] sm:$0xff]
  %v56 = vld [vmem:[%s3 + $0x8] sm:$0xff]
  %v57 = vld [vmem:[%s3 + $0x10] sm:$0xff]
  %v58 = vld [vmem:[%s3 + $0x18] sm:$0xff]
  %v59 = vld [vmem:[%s4] sm:$0x1]
  %v61 = vperm.slane %v59, 0
  %vm63 = vcmask 261120
  %v65 = vsel %vm63, %v54, 0
  %67 = vmatpush.msra.mxu0 0.0
  %68 = vmatpush.msra.mxu0 0.0
  %69 = vmatpush.msra.mxu0 0.0
  %70 = vmatpush.msra.mxu0 0.0
  %71 = vmatpush.msra.mxu0 0.0
  %72 = vmatpush.msra.mxu0 0.0
  %73 = vmatpush.msra.mxu0 0.0
  %74 = vmatpush.msra.mxu0 0.0
  %75 = vmatpush.msra.mxu0 0.0
  %76 = vmatpush.msra.mxu0 0.0
  %77 = vmatpush.msra.mxu0 0.0
  %78 = vmatpush.msra.mxu0 0.0
  %79 = vmatpush.msra.mxu0 %v58
  %80 = vmatpush.msra.mxu0 %v57
  %81 = vmatpush.msra.mxu0 %v56
  %82 = vmatpush.msra.mxu0 %v55
  %83 = vmatmul.f32.gmra.mxu0 %v65
  %v84 = vpop.f32.mrf.mxu0
  %v85 = vadd.f32 %v61, %v84
  %86 = vdwg.mxu0
  %vm87 = vcmask 23552
  %88 = vst.msk [vmem:[%s5] sm:$0xff] %vm87, %v85
  // Predicated region
  $region22: #{tpu_custom_call.1} parent=0 // pred_check
    _
  $region23: #{tpu_custom_call.1} parent=0 // pred_check_branch
    %90 = sbr.rel (0) target = $region25
  $region24: #{tpu_custom_call.1} parent=0 // pred_region
    _
  $region25: #{tpu_custom_call.1} parent=0 // pred_fallthru
    _
  // Predicated region
  $region26: #{tpu_custom_call.1} parent=0 // pred_check
    _
  $region27: #{tpu_custom_call.1} parent=0 // pred_check_branch
    %92 = sbr.rel (0) target = $region29
  $region28: #{tpu_custom_call.1} parent=0 // pred_region
    _
  $region29: #{tpu_custom_call.1} parent=0 // pred_fallthru
    _

</llo_original>
